<compile_context>
chip_gen: v7x
topology: tpu7x:2x2x1
jax: 0.10.0
libtpu: 0.0.40
codegen_flags: <defaults>
</compile_context>

<pallas_src>
import math

import jax
import jax.numpy as jnp
from jax.experimental import pallas as pl
from jax.experimental.pallas import tpu as pltpu

D_MODEL = 32
SEQ = 8
BATCH = 2
K = 5          # conv kernel size
PAD = 2        # conv padding ("same")
LN_EPS = 1e-5


def music_conv_kernel(x_ref,      # (B, S*D)  music features, flattened per row
                      tm_ref,     # (B, 2*D)  [:, :D] = t,  [:, D:] = CFG keep-mask (0/1)
                      wfold_ref,  # (S*D, D)  folded conv+mean weight
                      w12_ref,    # (2, D, D) [0] = w1' (LN affine folded), [1] = w2
                      slab_ref,   # (8, D)    rows: 0=bconv, 1=b1', 2=b2, 3=null token
                      out_ref):   # (B, D)
    D = out_ref.shape[1]

    x = x_ref[...]                                            # (B, S*D) f32

    # ---- Conv1d + mean(dim=-2), folded into one full-depth MXU matmul ----
    m = jnp.dot(x, wfold_ref[...], preferred_element_type=jnp.float32)   # (B, D)
    m = m + slab_ref[0:1, :]                                  # conv bias

    # ---- LayerNorm(d_model); affine (gamma/beta) already folded into w1'/b1' ----
    mu = jnp.mean(m, axis=-1, keepdims=True)
    var = jnp.mean((m - mu) ** 2, axis=-1, keepdims=True)
    xn = (m - mu) * jax.lax.rsqrt(var + LN_EPS)

    # ---- Linear -> SiLU -> Linear ----
    h = jnp.dot(xn, w12_ref[0], preferred_element_type=jnp.float32) + slab_ref[1:2, :]
    h = h * jax.nn.sigmoid(h)                                 # SiLU via EUP logistic
    h = jnp.dot(h, w12_ref[1], preferred_element_type=jnp.float32) + slab_ref[2:3, :]

    # ---- classifier-free-guidance blend (mask in {0,1}) + residual add ----
    t = tm_ref[:, :D]                                         # (B, D)
    mk = tm_ref[:, D:]                                        # (B, D) broadcast mask
    sel = mk * h + (1.0 - mk) * slab_ref[3:4, :]
    out_ref[...] = (t + sel).astype(out_ref.dtype)


def fold_conv_mean_weight(wconv, S):
    """Fold Conv1d(k=K, pad=PAD, stride=1) + mean over sequence into one
    (S*D, D) weight:  mean_s(conv(x))[b] == x[b].reshape(S*D) @ W_tilde.

    NOTE: wconv layout here is (K, D_in, D_out). PyTorch Conv1d checkpoints
    are (out_channels, in_channels, K) and must be permuted (2, 1, 0) first."""
    Kk, D, _ = wconv.shape
    j = jnp.arange(S)[:, None]                 # input sequence position
    k = jnp.arange(Kk)[None, :]                # conv tap
    s_out = j + PAD - k                        # output position this (j, k) feeds
    counts = ((s_out >= 0) & (s_out < S)).astype(jnp.float32)       # (S, K)
    w_fold = jnp.einsum('jk,kde->jde', counts, wconv) / S           # (S, D, D)
    return w_fold.reshape(S * D, D)


def music_conv_module(x_m, t, mask, params):
    """x_m: (B, S, D), t: (B, D), mask: (B,) bool. Returns (B, D)."""
    wconv, bconv, gamma, beta, w1, b1, w2, b2, null = params
    B, S, D = x_m.shape

    # ---- one-time wrapper-side parameter folding ----
    w_fold = fold_conv_mean_weight(wconv, S)                  # (S*D, D)
    w1p = gamma.reshape(D, 1) * w1                            # LN affine -> Linear1
    b1p = beta.reshape(1, D) @ w1 + b1
    w12 = jnp.stack([w1p, w2], axis=0)                        # (2, D, D)

    slab = jnp.zeros((8, D), jnp.float32)                     # pad to 8 sublanes
    slab = slab.at[0].set(bconv.reshape(D))
    slab = slab.at[1].set(b1p.reshape(D))
    slab = slab.at[2].set(b2.reshape(D))
    slab = slab.at[3].set(null.reshape(D))

    x_flat = x_m.reshape(B, S * D).astype(jnp.float32)
    mask_f = mask.astype(jnp.float32).reshape(B, 1)
    tm = jnp.concatenate(
        [t.astype(jnp.float32), jnp.broadcast_to(mask_f, (B, D))], axis=-1)  # (B, 2D)

    vmem = lambda: pl.BlockSpec(memory_space=pltpu.MemorySpace.VMEM)

    return pl.pallas_call(
        music_conv_kernel,
        out_shape=jax.ShapeDtypeStruct((B, D), t.dtype),
        in_specs=[vmem(), vmem(), vmem(), vmem(), vmem()],
        out_specs=vmem(),
    )(x_flat, tm, w_fold, w12, slab)


def init_params(key, d_model):
    ks = jax.random.split(key, 7)
    scale = 1.0 / math.sqrt(d_model)
    wconv = jax.random.normal(ks[0], (K, d_model, d_model), jnp.float32) * scale
    bconv = jax.random.normal(ks[1], (1, d_model), jnp.float32) * 0.02
    gamma = jnp.ones((1, d_model), jnp.float32)
    beta = jnp.zeros((1, d_model), jnp.float32)
    w1 = jax.random.normal(ks[2], (d_model, d_model), jnp.float32) * scale
    b1 = jax.random.normal(ks[3], (1, d_model), jnp.float32) * 0.02
    w2 = jax.random.normal(ks[4], (d_model, d_model), jnp.float32) * scale
    b2 = jax.random.normal(ks[5], (1, d_model), jnp.float32) * 0.02
    null = jax.random.normal(ks[6], (1, d_model), jnp.float32)   # music_parameter
    return (wconv, bconv, gamma, beta, w1, b1, w2, b2, null)


def reference(x_m, t, mask, params):
    """Pure-JAX reference mirroring the PyTorch forward (explicit conv + pad)."""
    wconv, bconv, gamma, beta, w1, b1, w2, b2, null = params
    B, S, D = x_m.shape
    x_pad = jnp.pad(x_m, ((0, 0), (PAD, PAD), (0, 0)))
    conv = jnp.zeros((B, S, D), jnp.float32)
    for k in range(K):
        conv = conv + jnp.einsum('bsd,de->bse', x_pad[:, k:k + S, :], wconv[k])
    conv = conv + bconv
    m = conv.mean(axis=1)                                   # (B, D)
    mu = m.mean(-1, keepdims=True)
    var = ((m - mu) ** 2).mean(-1, keepdims=True)
    xn = (m - mu) / jnp.sqrt(var + LN_EPS) * gamma + beta
    h = xn @ w1 + b1
    h = h * jax.nn.sigmoid(h)
    h = h @ w2 + b2
    sel = jnp.where(mask[:, None], h, null)
    return t + sel


if __name__ == "__main__":
    key = jax.random.PRNGKey(0)
    k_x, k_t, k_m, k_p = jax.random.split(key, 4)

    x_m = jax.random.normal(k_x, (BATCH, SEQ, D_MODEL), jnp.float32)
    t = jax.random.normal(k_t, (BATCH, D_MODEL), jnp.float32)
    params = init_params(k_p, D_MODEL)

    cond_drop_prob = 0.25
    # prob_mask_like((B,), 1 - cond_drop_prob): keep-mask drawn once, deterministically.
    mask = jax.random.uniform(k_m, (BATCH,)) < (1.0 - cond_drop_prob)

    out = music_conv_module(x_m, t, mask, params)
    out = jax.block_until_ready(out)

    ref = reference(x_m, t, mask, params)
    assert out.shape == (BATCH, D_MODEL)
    assert jnp.allclose(out, ref, atol=1e-4, rtol=1e-4), (
        f"max abs diff {jnp.max(jnp.abs(out - ref))}")

    print("KERNEL_OK")
</pallas_src>

<mosaic_0001>
module attributes {stable_mosaic.version = 11 : i64} {
  func.func @music_conv_kernel(%arg0: memref<2x256xf32, #tpu.memory_space<vmem>>, %arg1: memref<2x64xf32, #tpu.memory_space<vmem>>, %arg2: memref<256x32xf32, #tpu.memory_space<vmem>>, %arg3: memref<2x32x32xf32, #tpu.memory_space<vmem>>, %arg4: memref<8x32xf32, #tpu.memory_space<vmem>>, %arg5: memref<2x32xf32, #tpu.memory_space<vmem>>) attributes {dimension_semantics = [], scalar_prefetch = 0 : i64, scratch_operands = 0 : i64, tpu.core_type = #tpu.core_type<tc>} {
    %c0 = arith.constant 0 : index
    %c0_0 = arith.constant 0 : index
    %0 = vector.load %arg0[%c0, %c0_0] : memref<2x256xf32, #tpu.memory_space<vmem>>, vector<2x256xf32>
    %c0_1 = arith.constant 0 : index
    %c0_2 = arith.constant 0 : index
    %1 = vector.load %arg2[%c0_1, %c0_2] : memref<256x32xf32, #tpu.memory_space<vmem>>, vector<256x32xf32>
    %cst = arith.constant dense<0.000000e+00> : vector<2x32xf32>
    %2 = tpu.matmul %0, %1, %cst {dimension_numbers = #tpu.dot_dimension_numbers<[1], [0], [0], [1], [0, 0, 1, 1], [], []>} : vector<2x256xf32>, vector<256x32xf32>, vector<2x32xf32> -> vector<2x32xf32>
    %c0_3 = arith.constant 0 : index
    %c0_4 = arith.constant 0 : index
    %3 = vector.load %arg4[%c0_3, %c0_4] : memref<8x32xf32, #tpu.memory_space<vmem>>, vector<1x32xf32>
    %4 = vector.broadcast %3 : vector<1x32xf32> to vector<2x32xf32>
    %5 = arith.addf %2, %4 : vector<2x32xf32>
    %cst_5 = arith.constant dense<0.000000e+00> : vector<2xf32>
    %6 = vector.multi_reduction <add>, %5, %cst_5 [1] : vector<2x32xf32> to vector<2xf32>
    %7 = vector.shape_cast %6 : vector<2xf32> to vector<2x1xf32>
    %cst_6 = arith.constant 3.200000e+01 : f32
    %8 = vector.broadcast %cst_6 : f32 to vector<2x1xf32>
    %9 = arith.divf %7, %8 : vector<2x1xf32>
    %10 = vector.broadcast %9 : vector<2x1xf32> to vector<2x32xf32>
    %11 = arith.subf %5, %10 : vector<2x32xf32>
    %12 = arith.mulf %11, %11 : vector<2x32xf32>
    %cst_7 = arith.constant dense<0.000000e+00> : vector<2xf32>
    %13 = vector.multi_reduction <add>, %12, %cst_7 [1] : vector<2x32xf32> to vector<2xf32>
    %14 = vector.shape_cast %13 : vector<2xf32> to vector<2x1xf32>
    %cst_8 = arith.constant 3.200000e+01 : f32
    %15 = vector.broadcast %cst_8 : f32 to vector<2x1xf32>
    %16 = arith.divf %14, %15 : vector<2x1xf32>
    %17 = vector.broadcast %9 : vector<2x1xf32> to vector<2x32xf32>
    %18 = arith.subf %5, %17 : vector<2x32xf32>
    %cst_9 = arith.constant 9.99999974E-6 : f32
    %19 = vector.broadcast %cst_9 : f32 to vector<2x1xf32>
    %20 = arith.addf %16, %19 : vector<2x1xf32>
    %21 = math.rsqrt %20 : vector<2x1xf32>
    %22 = vector.broadcast %21 : vector<2x1xf32> to vector<2x32xf32>
    %23 = arith.mulf %18, %22 : vector<2x32xf32>
    %c0_10 = arith.constant 0 : index
    %c0_11 = arith.constant 0 : index
    %c0_12 = arith.constant 0 : index
    %24 = vector.load %arg3[%c0_10, %c0_11, %c0_12] : memref<2x32x32xf32, #tpu.memory_space<vmem>>, vector<1x32x32xf32>
    %25 = vector.shape_cast %24 : vector<1x32x32xf32> to vector<32x32xf32>
    %cst_13 = arith.constant dense<0.000000e+00> : vector<2x32xf32>
    %26 = tpu.matmul %23, %25, %cst_13 {dimension_numbers = #tpu.dot_dimension_numbers<[1], [0], [0], [1], [0, 0, 1, 1], [], []>} : vector<2x32xf32>, vector<32x32xf32>, vector<2x32xf32> -> vector<2x32xf32>
    %c1 = arith.constant 1 : index
    %c0_14 = arith.constant 0 : index
    %27 = vector.load %arg4[%c1, %c0_14] : memref<8x32xf32, #tpu.memory_space<vmem>>, vector<1x32xf32>
    %28 = vector.broadcast %27 : vector<1x32xf32> to vector<2x32xf32>
    %29 = arith.addf %26, %28 : vector<2x32xf32>
    %30 = arith.negf %29 : vector<2x32xf32>
    %31 = math.exp %30 : vector<2x32xf32>
    %cst_15 = arith.constant 1.000000e+00 : f32
    %32 = vector.broadcast %cst_15 : f32 to vector<2x32xf32>
    %33 = arith.addf %32, %31 : vector<2x32xf32>
    %34 = arith.divf %32, %33 : vector<2x32xf32>
    %35 = arith.mulf %29, %34 : vector<2x32xf32>
    %c1_16 = arith.constant 1 : index
    %c0_17 = arith.constant 0 : index
    %c0_18 = arith.constant 0 : index
    %36 = vector.load %arg3[%c1_16, %c0_17, %c0_18] : memref<2x32x32xf32, #tpu.memory_space<vmem>>, vector<1x32x32xf32>
    %37 = vector.shape_cast %36 : vector<1x32x32xf32> to vector<32x32xf32>
    %cst_19 = arith.constant dense<0.000000e+00> : vector<2x32xf32>
    %38 = tpu.matmul %35, %37, %cst_19 {dimension_numbers = #tpu.dot_dimension_numbers<[1], [0], [0], [1], [0, 0, 1, 1], [], []>} : vector<2x32xf32>, vector<32x32xf32>, vector<2x32xf32> -> vector<2x32xf32>
    %c2 = arith.constant 2 : index
    %c0_20 = arith.constant 0 : index
    %39 = vector.load %arg4[%c2, %c0_20] : memref<8x32xf32, #tpu.memory_space<vmem>>, vector<1x32xf32>
    %40 = vector.broadcast %39 : vector<1x32xf32> to vector<2x32xf32>
    %41 = arith.addf %38, %40 : vector<2x32xf32>
    %c0_21 = arith.constant 0 : index
    %c0_22 = arith.constant 0 : index
    %42 = vector.load %arg1[%c0_21, %c0_22] : memref<2x64xf32, #tpu.memory_space<vmem>>, vector<2x32xf32>
    %c0_23 = arith.constant 0 : index
    %c32 = arith.constant 32 : index
    %43 = vector.load %arg1[%c0_23, %c32] : memref<2x64xf32, #tpu.memory_space<vmem>>, vector<2x32xf32>
    %44 = arith.mulf %43, %41 : vector<2x32xf32>
    %cst_24 = arith.constant 1.000000e+00 : f32
    %45 = vector.broadcast %cst_24 : f32 to vector<2x32xf32>
    %46 = arith.subf %45, %43 : vector<2x32xf32>
    %c3 = arith.constant 3 : index
    %c0_25 = arith.constant 0 : index
    %47 = vector.load %arg4[%c3, %c0_25] : memref<8x32xf32, #tpu.memory_space<vmem>>, vector<1x32xf32>
    %48 = vector.broadcast %47 : vector<1x32xf32> to vector<2x32xf32>
    %49 = arith.mulf %46, %48 : vector<2x32xf32>
    %50 = arith.addf %44, %49 : vector<2x32xf32>
    %51 = arith.addf %42, %50 : vector<2x32xf32>
    %c0_26 = arith.constant 0 : index
    %c0_27 = arith.constant 0 : index
    %52 = vector.load %arg5[%c0_26, %c0_27] : memref<2x32xf32, #tpu.memory_space<vmem>>, vector<2x32xf32>
    tpu.vector_store %arg5[%c0_26, %c0_27], %51 {strides = array<i32>} : memref<2x32xf32, #tpu.memory_space<vmem>>, vector<2x32xf32>,
    return
  }
}

</mosaic_0001>

<llo_original>
// kernel: tpu_custom_call.1
$region0: #{tpu_custom_call.1}
  #allocation0 [shape = 'u32[]', space=smem, size = 0x4, offset = 0x4, fixed_abs, tag = 'smem constant byte address 0x4 - core index']
  #allocation1 [shape = 'u32[144,128]{1,0:T(1,128)}', space=vmem, size = 0x12000, scoped, tag = 'internal scratch']
  %s0 = inlined_call_operand.vmem [shape: f32[2,256], index: 0, kind: input, shape index: {}]
  %s1 = inlined_call_operand.vmem [shape: f32[2,64], index: 1, kind: input, shape index: {}]
  %s2 = inlined_call_operand.vmem [shape: f32[256,32], index: 2, kind: input, shape index: {}]
  %s3 = inlined_call_operand.vmem [shape: f32[2,32,32], index: 3, kind: input, shape index: {}]
  %s4 = inlined_call_operand.vmem [shape: f32[8,32], index: 4, kind: input, shape index: {}]
  %s5 = inlined_call_operand.hbm [shape: f32[2,32], index: 5, kind: output, shape index: {}]
  %s6 = sld [smem:[#allocation0]]
  $region30: #{tpu_custom_call.1} parent=0
    _
  %s8 = ssub.s32 1, %s6
  %s9 = scalar_select 0, %s8, %s6
  $region1: #{tpu_custom_call.1} parent=0
    #allocation2 [shape = 'u8[1024]{0}', space=vmem, size = 0x400, scoped, tag = 'output window, operand 0, single buffered']
    #allocation3 [shape = 's32[1]{0}', space=sflag, size = 0x4, scoped, tag = 'scoped memory for tpu_custom_call.1']
    %10 = vsyncpa [#allocation3], 0
    // Predicated region
    $region2: #{tpu_custom_call.1} parent=1 // pred_check
      _
    $region3: #{tpu_custom_call.1} parent=1 // pred_check_branch
      %12 = sbr.rel (0) target = $region5
    $region4: #{tpu_custom_call.1} parent=1 // pred_region
      _
    $region5: #{tpu_custom_call.1} parent=1 // pred_fallthru
      _
    // Predicated region
    $region6: #{tpu_custom_call.1} parent=1 // pred_check
      _
    $region7: #{tpu_custom_call.1} parent=1 // pred_check_branch
      %14 = sbr.rel (0) target = $region9
    $region8: #{tpu_custom_call.1} parent=1 // pred_region
      _
    $region9: #{tpu_custom_call.1} parent=1 // pred_fallthru
      _
    // Predicated region
    $region10: #{tpu_custom_call.1} parent=1 // pred_check
      _
    $region11: #{tpu_custom_call.1} parent=1 // pred_check_branch
      %16 = sbr.rel (0) target = $region13
    $region12: #{tpu_custom_call.1} parent=1 // pred_region
      _
    $region13: #{tpu_custom_call.1} parent=1 // pred_fallthru
      _
    // Predicated region
    $region14: #{tpu_custom_call.1} parent=1 // pred_check
      _
    $region15: #{tpu_custom_call.1} parent=1 // pred_check_branch
      %18 = sbr.rel (0) target = $region17
    $region16: #{tpu_custom_call.1} parent=1 // pred_region
      _
    $region17: #{tpu_custom_call.1} parent=1 // pred_fallthru
      _
    // Predicated region
    $region18: #{tpu_custom_call.1} parent=1 // pred_check
      _
    $region19: #{tpu_custom_call.1} parent=1 // pred_check_branch
      %20 = sbr.rel (0) target = $region21
    $region20: #{tpu_custom_call.1} parent=1 // pred_region
      _
    $region21: #{tpu_custom_call.1} parent=1 // pred_fallthru
      _
    %v21 = vld [vmem:[%s0] sm:$0xf]
    %v22 = vld [vmem:[%s2] sm:$0xff]
    %v23 = vld [vmem:[%s2 + $0x8] sm:$0xff]
    %v24 = vld [vmem:[%s2 + $0x10] sm:$0xff]
    %v25 = vld [vmem:[%s2 + $0x18] sm:$0xff]
    %v26 = vld [vmem:[%s2 + $0x20] sm:$0xff]
    %v27 = vld [vmem:[%s2 + $0x28] sm:$0xff]
    %v28 = vld [vmem:[%s2 + $0x30] sm:$0xff]
    %v29 = vld [vmem:[%s2 + $0x38] sm:$0xff]
    %v30 = vld [vmem:[%s2 + $0x40] sm:$0xff]
    %v31 = vld [vmem:[%s2 + $0x48] sm:$0xff]
    %v32 = vld [vmem:[%s2 + $0x50] sm:$0xff]
    %v33 = vld [vmem:[%s2 + $0x58] sm:$0xff]
    %v34 = vld [vmem:[%s2 + $0x60] sm:$0xff]
    %v35 = vld [vmem:[%s2 + $0x68] sm:$0xff]
    %v36 = vld [vmem:[%s2 + $0x70] sm:$0xff]
    %v37 = vld [vmem:[%s2 + $0x78] sm:$0xff]
    %v38 = vld [vmem:[%s2 + $0x80] sm:$0xff]
    %v39 = vld [vmem:[%s2 + $0x88] sm:$0xff]
    %v40 = vld [vmem:[%s2 + $0x90] sm:$0xff]
    %v41 = vld [vmem:[%s2 + $0x98] sm:$0xff]
    %v42 = vld [vmem:[%s2 + $0xa0] sm:$0xff]
    %v43 = vld [vmem:[%s2 + $0xa8] sm:$0xff]
    %v44 = vld [vmem:[%s2 + $0xb0] sm:$0xff]
    %v45 = vld [vmem:[%s2 + $0xb8] sm:$0xff]
    %v46 = vld [vmem:[%s2 + $0xc0] sm:$0xff]
    %v47 = vld [vmem:[%s2 + $0xc8] sm:$0xff]
    %v48 = vld [vmem:[%s2 + $0xd0] sm:$0xff]
    %v49 = vld [vmem:[%s2 + $0xd8] sm:$0xff]
    %v50 = vld [vmem:[%s2 + $0xe0] sm:$0xff]
    %v51 = vld [vmem:[%s2 + $0xe8] sm:$0xff]
    %v52 = vld [vmem:[%s2 + $0xf0] sm:$0xff]
    %v53 = vld [vmem:[%s2 + $0xf8] sm:$0xff]
    %v54 = vld [vmem:[%s4] sm:$0x1]
    %v55 = vlaneseq
    %v56 = vshrl.u32 %v55, 7
    %v57 = vsub.s32 0, %v56
    %v58 = vrot.slane %v54, %v57
    %v61 = vunpack.c.l.s4 1983009808
    %v62 = vunpack.c.0.s8 %v61
    %v63 = vlaneseq
    %v64 = vshrl.u32 %v63, 7
    %v65 = vsub.s32 %v62, %v64
    %v66 = vrot.slane %v21, %v65
    %v67 = vcombine.high %v66, %v66
    %70 = vmatprep.subr.mxu0 0.0
    %71 = vmatpush1.msra.mxu0 %v22
    %72 = vmatprep.subr.mxu0 0.0
    %73 = vmatpush1.msra.mxu0 %v23
    %74 = vmatprep.subr.mxu0 0.0
    %75 = vmatpush1.msra.mxu0 %v24
    %76 = vmatprep.subr.mxu0 0.0
    %77 = vmatpush1.msra.mxu0 %v25
    %78 = vmatprep.subr.mxu0 0.0
    %79 = vmatpush1.msra.mxu0 %v26
    %80 = vmatprep.subr.mxu0 0.0
    %81 = vmatpush1.msra.mxu0 %v27
    %82 = vmatprep.subr.mxu0 0.0
    %83 = vmatpush1.msra.mxu0 %v28
    %84 = vmatprep.subr.mxu0 0.0
    %85 = vmatpush1.msra.mxu0 %v29
    %86 = vmatprep.subr.mxu0 0.0
    %87 = vmatpush1.msra.mxu0 %v30
    %88 = vmatprep.subr.mxu0 0.0
    %89 = vmatpush1.msra.mxu0 %v31
    %90 = vmatprep.subr.mxu0 0.0
    %91 = vmatpush1.msra.mxu0 %v32
    %92 = vmatprep.subr.mxu0 0.0
    %93 = vmatpush1.msra.mxu0 %v33
    %94 = vmatprep.subr.mxu0 0.0
    %95 = vmatpush1.msra.mxu0 %v34
    %96 = vmatprep.subr.mxu0 0.0
    %97 = vmatpush1.msra.mxu0 %v35
    %98 = vmatprep.subr.mxu0 0.0
    %99 = vmatpush1.msra.mxu0 %v36
    %100 = vmatprep.subr.mxu0 0.0
    %101 = vmatpush1.msra.mxu0 %v37
    %102 = vmatprep.subr.mxu0 0.0
    %103 = vmatpush1.msra.mxu0 %v38
    %104 = vmatprep.subr.mxu0 0.0
    %105 = vmatpush1.msra.mxu0 %v39
    %106 = vmatprep.subr.mxu0 0.0
    %107 = vmatpush1.msra.mxu0 %v40
    %108 = vmatprep.subr.mxu0 0.0
    %109 = vmatpush1.msra.mxu0 %v41
    %110 = vmatprep.subr.mxu0 0.0
    %111 = vmatpush1.msra.mxu0 %v42
    %112 = vmatprep.subr.mxu0 0.0
    %113 = vmatpush1.msra.mxu0 %v43
    %114 = vmatprep.subr.mxu0 0.0
    %115 = vmatpush1.msra.mxu0 %v44
    %116 = vmatprep.subr.mxu0 0.0
    %117 = vmatpush1.msra.mxu0 %v45
    %118 = vmatprep.subr.mxu0 0.0
    %119 = vmatpush1.msra.mxu0 %v46
    %120 = vmatprep.subr.mxu0 0.0
    %121 = vmatpush1.msra.mxu0 %v47
    %122 = vmatprep.subr.mxu0 0.0
    %123 = vmatpush1.msra.mxu0 %v48
    %124 = vmatprep.subr.mxu0 0.0
    %125 = vmatpush1.msra.mxu0 %v49
    %126 = vmatprep.subr.mxu0 0.0
    %127 = vmatpush1.msra.mxu0 %v50
    %128 = vmatprep.subr.mxu0 0.0
    %129 = vmatpush1.msra.mxu0 %v51
    %130 = vmatprep.subr.mxu0 0.0
    %131 = vmatpush1.msra.mxu0 %v52
    %132 = vmatprep.subr.mxu0 0.0
    %133 = vmatpush1.msra.mxu0 %v53
    %134 = vmatprep.mubr.f32.mxu0 %v67
    %135 = vmatmul.mubr.f32.gmra.mrb[0].mxu0 %v66
    %v136 = vpop.f32.mrb[0].mxu0
    %v137 = vadd.f32 %v58, %v136
    %v138 = vpop.f32.mrb[0].mxu0
    %139 = vdwg.mxu0
    %vm140 = vcmask 254976
    %v141 = vsel %vm140, %v137, 0.0
    %142 = vadd.xlane.f32.xlu0 %v141
    %v143 = vpop.xlane.xlu0 %142
    %v144 = vrcp.pop 32.0
    %v145 = vmul.f32 %v143, %v144
    %v146 = vsub.f32 %v137, %v145
    %v147 = vmul.f32 %v146, %v146
    %v148 = vsel %vm140, %v147, 0.0
    %149 = vadd.xlane.f32.xlu0 %v148
    %v150 = vpop.xlane.xlu0 %149
    %v151 = vmul.f32 %v150, %v144
    %v152 = vadd.f32 %v151, 1e-05
    %v153 = vrsqrt.pop %v152
    %v154 = vmul.f32 %v146, %v153
    %v155 = vld [vmem:[%s3] sm:$0xff]
    %v156 = vld [vmem:[%s3 + $0x8] sm:$0xff]
    %v157 = vld [vmem:[%s3 + $0x10] sm:$0xff]
    %v158 = vld [vmem:[%s3 + $0x18] sm:$0xff]
    %v159 = vld [vmem:[%s4 + $0x1] sm:$0x1]
    %v160 = vlaneseq
    %v161 = vshrl.u32 %v160, 7
    %v162 = vsub.s32 0, %v161
    %v163 = vrot.slane %v159, %v162
    %vm164 = vcmask 261120
    %v166 = vsel %vm164, %v154, 0
    %168 = vmatprep.subr.mxu0 0.0
    %169 = vmatpush1.msra.mxu0 %v155
    %170 = vmatprep.subr.mxu0 0.0
    %171 = vmatpush1.msra.mxu0 %v156
    %172 = vmatprep.subr.mxu0 0.0
    %173 = vmatpush1.msra.mxu0 %v157
    %174 = vmatprep.subr.mxu0 0.0
    %175 = vmatpush1.msra.mxu0 %v158
    %176 = vmatprep.subr.mxu0 0.0
    %177 = vmatpush1.msra.mxu0 0.0
    %178 = vmatprep.subr.mxu0 0.0
    %179 = vmatpush1.msra.mxu0 0.0
    %180 = vmatprep.subr.mxu0 0.0
    %181 = vmatpush1.msra.mxu0 0.0
    %182 = vmatprep.subr.mxu0 0.0
    %183 = vmatpush1.msra.mxu0 0.0
    %184 = vmatprep.subr.mxu0 0.0
    %185 = vmatpush1.msra.mxu0 0.0
    %186 = vmatprep.subr.mxu0 0.0
    %187 = vmatpush1.msra.mxu0 0.0
    %188 = vmatprep.subr.mxu0 0.0
    %189 = vmatpush1.msra.mxu0 0.0
    %190 = vmatprep.subr.mxu0 0.0
    %191 = vmatpush1.msra.mxu0 0.0
    %192 = vmatprep.subr.mxu0 0.0
    %193 = vmatpush1.msra.mxu0 0.0
    %194 = vmatprep.subr.mxu0 0.0
    %195 = vmatpush1.msra.mxu0 0.0
    %196 = vmatprep.subr.mxu0 0.0
    %197 = vmatpush1.msra.mxu0 0.0
    %198 = vmatprep.subr.mxu0 0.0
    %199 = vmatpush1.msra.mxu0 0.0
    %200 = vmatprep.subr.mxu0 0.0
    %201 = vmatpush1.msra.mxu0 0.0
    %202 = vmatprep.subr.mxu0 0.0
    %203 = vmatpush1.msra.mxu0 0.0
    %204 = vmatprep.subr.mxu0 0.0
    %205 = vmatpush1.msra.mxu0 0.0
    %206 = vmatprep.subr.mxu0 0.0
    %207 = vmatpush1.msra.mxu0 0.0
    %208 = vmatprep.subr.mxu0 0.0
    %209 = vmatpush1.msra.mxu0 0.0
    %210 = vmatprep.subr.mxu0 0.0
    %211 = vmatpush1.msra.mxu0 0.0
    %212 = vmatprep.subr.mxu0 0.0
    %213 = vmatpush1.msra.mxu0 0.0
    %214 = vmatprep.subr.mxu0 0.0
    %215 = vmatpush1.msra.mxu0 0.0
    %216 = vmatprep.subr.mxu0 0.0
    %217 = vmatpush1.msra.mxu0 0.0
    %218 = vmatprep.subr.mxu0 0.0
    %219 = vmatpush1.msra.mxu0 0.0
    %220 = vmatprep.subr.mxu0 0.0
    %221 = vmatpush1.msra.mxu0 0.0
    %222 = vmatprep.subr.mxu0 0.0
    %223 = vmatpush1.msra.mxu0 0.0
    %224 = vmatprep.subr.mxu0 0.0
    %225 = vmatpush1.msra.mxu0 0.0
    %226 = vmatprep.subr.mxu0 0.0
    %227 = vmatpush1.msra.mxu0 0.0
    %228 = vmatprep.subr.mxu0 0.0
    %229 = vmatpush1.msra.mxu0 0.0
    %230 = vmatprep.subr.mxu0 0.0
    %231 = vmatpush1.msra.mxu0 0.0
    %232 = vmatprep.mubr.f32.mxu0 0.0
    %233 = vmatmul.mubr.f32.gmra.mrb[0].mxu0 %v166
    %v234 = vpop.f32.mrb[0].mxu0
    %v235 = vadd.f32 %v163, %v234
    %v236 = vpop.f32.mrb[0].mxu0
    %237 = vdwg.mxu0
    %v238 = vxor.u32 %v235, 2147483648
    %v239 = vmul.f32 %v238, 1.442695
    %v240 = vpow.pop %v239
    %v241 = vadd.f32 %v240, 1.0
    %v242 = vrcp.pop %v241
    %v243 = vmul.f32 1.0, %v242
    %v244 = vmul.f32 %v235, %v243
    %s245 = scalar_lea.vmem %s3, 32
    %v246 = vld [vmem:[%s245] sm:$0xff]
    %v247 = vld [vmem:[%s245 + $0x8] sm:$0xff]
    %v248 = vld [vmem:[%s245 + $0x10] sm:$0xff]
    %v249 = vld [vmem:[%s245 + $0x18] sm:$0xff]
    %v250 = vld [vmem:[%s4 + $0x2] sm:$0x1]
    %v251 = vlaneseq
    %v252 = vshrl.u32 %v251, 7
    %v253 = vsub.s32 0, %v252
    %v254 = vrot.slane %v250, %v253
    %v256 = vsel %vm164, %v244, 0
    %258 = vmatprep.subr.mxu0 0.0
    %259 = vmatpush1.msra.mxu0 %v246
    %260 = vmatprep.subr.mxu0 0.0
    %261 = vmatpush1.msra.mxu0 %v247
    %262 = vmatprep.subr.mxu0 0.0
    %263 = vmatpush1.msra.mxu0 %v248
    %264 = vmatprep.subr.mxu0 0.0
    %265 = vmatpush1.msra.mxu0 %v249
    %266 = vmatprep.subr.mxu0 0.0
    %267 = vmatpush1.msra.mxu0 0.0
    %268 = vmatprep.subr.mxu0 0.0
    %269 = vmatpush1.msra.mxu0 0.0
    %270 = vmatprep.subr.mxu0 0.0
    %271 = vmatpush1.msra.mxu0 0.0
    %272 = vmatprep.subr.mxu0 0.0
    %273 = vmatpush1.msra.mxu0 0.0
    %274 = vmatprep.subr.mxu0 0.0
    %275 = vmatpush1.msra.mxu0 0.0
    %276 = vmatprep.subr.mxu0 0.0
    %277 = vmatpush1.msra.mxu0 0.0
    %278 = vmatprep.subr.mxu0 0.0
    %279 = vmatpush1.msra.mxu0 0.0
    %280 = vmatprep.subr.mxu0 0.0
    %281 = vmatpush1.msra.mxu0 0.0
    %282 = vmatprep.subr.mxu0 0.0
    %283 = vmatpush1.msra.mxu0 0.0
    %284 = vmatprep.subr.mxu0 0.0
    %285 = vmatpush1.msra.mxu0 0.0
    %286 = vmatprep.subr.mxu0 0.0
    %287 = vmatpush1.msra.mxu0 0.0
    %288 = vmatprep.subr.mxu0 0.0
    %289 = vmatpush1.msra.mxu0 0.0
    %290 = vmatprep.subr.mxu0 0.0
    %291 = vmatpush1.msra.mxu0 0.0
    %292 = vmatprep.subr.mxu0 0.0
    %293 = vmatpush1.msra.mxu0 0.0
    %294 = vmatprep.subr.mxu0 0.0
    %295 = vmatpush1.msra.mxu0 0.0
    %296 = vmatprep.subr.mxu0 0.0
    %297 = vmatpush1.msra.mxu0 0.0
    %298 = vmatprep.subr.mxu0 0.0
    %299 = vmatpush1.msra.mxu0 0.0
    %300 = vmatprep.subr.mxu0 0.0
    %301 = vmatpush1.msra.mxu0 0.0
    %302 = vmatprep.subr.mxu0 0.0
    %303 = vmatpush1.msra.mxu0 0.0
    %304 = vmatprep.subr.mxu0 0.0
    %305 = vmatpush1.msra.mxu0 0.0
    %306 = vmatprep.subr.mxu0 0.0
    %307 = vmatpush1.msra.mxu0 0.0
    %308 = vmatprep.subr.mxu0 0.0
    %309 = vmatpush1.msra.mxu0 0.0
    %310 = vmatprep.subr.mxu0 0.0
    %311 = vmatpush1.msra.mxu0 0.0
    %312 = vmatprep.subr.mxu0 0.0
    %313 = vmatpush1.msra.mxu0 0.0
    %314 = vmatprep.subr.mxu0 0.0
    %315 = vmatpush1.msra.mxu0 0.0
    %316 = vmatprep.subr.mxu0 0.0
    %317 = vmatpush1.msra.mxu0 0.0
    %318 = vmatprep.subr.mxu0 0.0
    %319 = vmatpush1.msra.mxu0 0.0
    %320 = vmatprep.subr.mxu0 0.0
    %321 = vmatpush1.msra.mxu0 0.0
    %322 = vmatprep.mubr.f32.mxu0 0.0
    %323 = vmatmul.mubr.f32.gmra.mrb[0].mxu0 %v256
    %v324 = vpop.f32.mrb[0].mxu0
    %v325 = vadd.f32 %v254, %v324
    %v326 = vpop.f32.mrb[0].mxu0
    %327 = vdwg.mxu0
    %v328 = vld [vmem:[%s1] sm:$0x3]
    %330 = vrot.lane.b32.xlu0 %v325, 32
    %v331 = vpop.permute.xlu0 %330
    %v333 = vmul.f32 %v328, %v331
    %v334 = vsub.f32 1.0, %v328
    %v335 = vld [vmem:[%s4 + $0x3] sm:$0x1]
    %v336 = vlaneseq
    %v337 = vshrl.u32 %v336, 7
    %v338 = vsub.s32 0, %v337
    %v339 = vrot.slane %v335, %v338
    %341 = vrot.lane.b32.xlu0 %v339, 32
    %v342 = vpop.permute.xlu0 %341
    %v344 = vmul.f32 %v334, %v342
    %v345 = vadd.f32 %v333, %v344
    %347 = vrot.lane.b32.xlu0 %v345, 96
    %v348 = vpop.permute.xlu0 %347
    %v350 = vadd.f32 %v328, %v348
    %351 = vst.msk [vmem:[#allocation2] sm:$0x3] %vm140, %v350
    // Predicated region
    $region22: #{tpu_custom_call.1} parent=1 // pred_check
      _
    $region23: #{tpu_custom_call.1} parent=1 // pred_check_branch
      %353 = sbr.rel (0) target = $region25
    $region24: #{tpu_custom_call.1} parent=1 // pred_region
      %s355 = ssub.s32 32, 32
      %356 = vsyncadd [#allocation3], %s355
      %s358 = sshll.u32 [#allocation2], 4
      %s359 = int_to_ptr.vmem [resolvable:$true] %s358
      %361 = dma.vmem_to_hbm [thread:$0]  %s359, 32, %s5, [#allocation3]
    $region25: #{tpu_custom_call.1} parent=1 // pred_fallthru
      _
    // Predicated region
    $region26: #{tpu_custom_call.1} parent=1 // pred_check
      _
    $region27: #{tpu_custom_call.1} parent=1 // pred_check_branch
      %363 = sbr.rel (0) target = $region29
    $region28: #{tpu_custom_call.1} parent=1 // pred_region
      %364 = dma.done [#allocation3], 32
    $region29: #{tpu_custom_call.1} parent=1 // pred_fallthru
      _
    %365 = vsyncpa [#allocation3], 1

</llo_original>
